<compile_context>
chip_gen: v7x
topology: tpu7x:2x2x1
jax: 0.10.0
libtpu: 0.0.40
codegen_flags: <defaults>
</compile_context>

<pallas_src>
import functools

import jax
import jax.numpy as jnp
from jax.experimental import pallas as pl
from jax.experimental.pallas import tpu as pltpu

DROPOUT_PS = tuple(0.1 * i for i in range(1, 6))  # p = 0.1 .. 0.5
_GOLDEN = 0x9E3779B9
_SAMPLE_SALTS = (0x3C6EF372, 0xDAA66D2B, 0x78DDE6E4, 0x1715609D, 0xB54CDA56)


def _fmix32(x):
    """lowbias32 finalizer: good 32-bit avalanche, pure VPU int ops."""
    x = x ^ (x >> 16)
    x = x * jnp.uint32(0x7FEB352D)
    x = x ^ (x >> 15)
    x = x * jnp.uint32(0x846CA68B)
    x = x ^ (x >> 16)
    return x


def _multi_sample_head_kernel(seed_ref, x_ref, w_ref, b_ref, *rest,
                              total_rows, tile_m, with_loss):
    # seed_ref : SMEM (1,) int32
    # x_ref    : VMEM (TM, H) f32 hidden states (tile)
    # w_ref    : VMEM (H, L)  bf16 cls weight (transposed), resident
    # b_ref    : VMEM (1, L)  f32 cls bias, resident
    # rest     : [y_ref (TM, L)],  logits_ref (TM, L),  [loss_ref (1, 8, 128)]
    if with_loss:
        y_ref, logits_ref, loss_ref = rest
    else:
        (logits_ref,) = rest

    i = pl.program_id(0)
    x = x_ref[...].astype(jnp.float32)
    tm, h = x.shape

    # ---- counter-based hash PRNG -> 5 independent dropout masks ----
    # Global element index (unique per element of the full (M, H) activation,
    # modulo 2^32 - fine for hashing at realistic M*H).
    row = jax.lax.broadcasted_iota(jnp.uint32, (tm, h), 0)
    col = jax.lax.broadcasted_iota(jnp.uint32, (tm, h), 1)
    base_row = (i * tile_m).astype(jnp.uint32)
    lin = (row + base_row) * jnp.uint32(h) + col
    seed = seed_ref[0].astype(jnp.uint32)
    h0 = _fmix32(lin * jnp.uint32(_GOLDEN) + seed)

    # Combined inverted-dropout scale: mean_k( mask_k / (1 - p_k) ).
    n_samples = len(DROPOUT_PS)
    scale = jnp.zeros((tm, h), jnp.float32)
    for k, p in enumerate(DROPOUT_PS):
        bits = _fmix32(h0 ^ jnp.uint32(_SAMPLE_SALTS[k]))
        thresh = jnp.uint32(int(round(p * 2.0 ** 32)) & 0xFFFFFFFF)
        coef = jnp.float32(1.0 / (n_samples * (1.0 - p)))
        scale = scale + jnp.where(bits >= thresh, coef, jnp.float32(0.0))

    # ---- single bf16 MXU matmul for the whole 5-sample average ----
    xd = (x * scale).astype(jnp.bfloat16)
    acc = jnp.dot(xd, w_ref[...], preferred_element_type=jnp.float32)
    logits = acc + b_ref[...].astype(jnp.float32)   # bias added once (hoisted)
    logits_ref[...] = logits.astype(logits_ref.dtype)

    # ---- per-tile partial MSE sum (padded rows masked out) ----
    if with_loss:
        ridx = jax.lax.broadcasted_iota(jnp.int32, (tm, 1), 0) + i * tile_m
        valid = (ridx < total_rows).astype(jnp.float32)
        diff = (logits - y_ref[...].astype(jnp.float32)) * valid
        partial = jnp.sum(diff * diff)
        loss_ref[...] = jnp.broadcast_to(partial, loss_ref.shape)


def _choose_tile_m(m, h):
    """Largest M-tile (multiple of 8, <=512) keeping the x tile ~<=2 MiB."""
    budget_rows = max(8, (2 * 1024 * 1024) // (h * 4))
    tm = min(512, budget_rows)
    tm = max(8, (tm // 8) * 8)
    m_up = ((m + 7) // 8) * 8
    return min(tm, m_up)


def multi_sample_head(hidden_state, weight, bias, labels=None, seed=0):
    """hidden_state: (B, S, H) f32; weight: (L, H); bias: (L,);
    labels: (B, S, L) or None."""
    B, S, H = hidden_state.shape
    L = weight.shape[0]
    M = B * S

    tm = _choose_tile_m(M, H)
    num_tiles = pl.cdiv(M, tm)
    m_pad = num_tiles * tm

    x = hidden_state.reshape(M, H).astype(jnp.float32)
    if m_pad != M:
        x = jnp.pad(x, ((0, m_pad - M), (0, 0)))
    w_bf = jnp.transpose(weight).astype(jnp.bfloat16)   # (H, L)
    b2 = bias.reshape(1, L).astype(jnp.float32)
    seed_arr = jnp.asarray([seed], dtype=jnp.int32)

    with_loss = labels is not None
    kernel = functools.partial(
        _multi_sample_head_kernel,
        total_rows=M, tile_m=tm, with_loss=with_loss)

    in_specs = [
        pl.BlockSpec(memory_space=pltpu.MemorySpace.SMEM),   # seed
        pl.BlockSpec((tm, H), lambda i: (i, 0)),             # x tile
        pl.BlockSpec((H, L), lambda i: (0, 0)),              # w^T (resident)
        pl.BlockSpec((1, L), lambda i: (0, 0)),              # bias (resident)
    ]
    args = [seed_arr, x, w_bf, b2]
    out_shapes = [jax.ShapeDtypeStruct((m_pad, L), jnp.float32)]
    out_specs = [pl.BlockSpec((tm, L), lambda i: (i, 0))]

    if with_loss:
        y = labels.reshape(M, L).astype(jnp.float32)
        if m_pad != M:
            y = jnp.pad(y, ((0, m_pad - M), (0, 0)))
        in_specs.append(pl.BlockSpec((tm, L), lambda i: (i, 0)))
        args.append(y)
        out_shapes.append(
            jax.ShapeDtypeStruct((num_tiles, 8, 128), jnp.float32))
        out_specs.append(pl.BlockSpec((1, 8, 128), lambda i: (i, 0, 0)))

    outs = pl.pallas_call(
        kernel,
        out_shape=tuple(out_shapes),
        grid=(num_tiles,),
        in_specs=in_specs,
        out_specs=tuple(out_specs),
        compiler_params=pltpu.CompilerParams(
            dimension_semantics=("parallel",)),
    )(*args)

    if with_loss:
        logits_pad, loss_parts = outs
        loss = jnp.sum(loss_parts[:, 0, 0]) / jnp.float32(M * L)
    else:
        (logits_pad,) = outs
        loss = jnp.float32(0.0)

    logits = logits_pad[:M].reshape(B, S, L)
    return {"logits": logits, "loss": loss}


if __name__ == "__main__":
    # Small, deterministic example: batch=2, seq=8, hidden=128, num_labels=6.
    key = jax.random.PRNGKey(0)
    k_x, k_y, k_w, k_b = jax.random.split(key, 4)

    B, S, H, L = 2, 8, 128, 6
    hidden_state = jax.random.normal(k_x, (B, S, H), dtype=jnp.float32)
    labels = jax.random.normal(k_y, (B, S, L), dtype=jnp.float32)
    weight = jax.random.normal(k_w, (L, H), dtype=jnp.float32) * (1.0 / jnp.sqrt(H))
    bias = jax.random.normal(k_b, (L,), dtype=jnp.float32) * 0.01

    out = multi_sample_head(hidden_state, weight, bias, labels=labels, seed=1234)
    logits = jax.block_until_ready(out["logits"])
    loss = jax.block_until_ready(out["loss"])

    assert logits.shape == (B, S, L)
    assert bool(jnp.all(jnp.isfinite(logits)))
    assert bool(jnp.isfinite(loss))

    # Also exercise the labels=None (inference / no-loss) variant.
    out2 = multi_sample_head(hidden_state, weight, bias, labels=None, seed=7)
    jax.block_until_ready(out2["logits"])
    assert out2["logits"].shape == (B, S, L)

    print("KERNEL_OK")
</pallas_src>

<mosaic_0001>
module attributes {stable_mosaic.version = 11 : i64} {
  func.func @_multi_sample_head_kernel(%arg0: i32, %arg1: memref<1xi32, #tpu.memory_space<smem>>, %arg2: memref<16x128xf32, #tpu.memory_space<vmem>>, %arg3: memref<128x6xbf16, #tpu.memory_space<vmem>>, %arg4: memref<1x6xf32, #tpu.memory_space<vmem>>, %arg5: memref<16x6xf32, #tpu.memory_space<vmem>>, %arg6: memref<16x6xf32, #tpu.memory_space<vmem>>, %arg7: memref<1x8x128xf32, #tpu.memory_space<vmem>>) attributes {dimension_semantics = [#tpu.dimension_semantics<parallel>], iteration_bounds = array<i64: 1>, scalar_prefetch = 0 : i64, scratch_operands = 0 : i64, tpu.core_type = #tpu.core_type<tc>, window_params = [{transform_indices = @transform_0, window_bounds = array<i64: 1>}, {transform_indices = @transform_1, window_bounds = array<i64: 16, 128>}, {pipeline_mode = #tpu.pipeline_mode<synchronous>, transform_indices = @transform_2, window_bounds = array<i64: 128, 6>}, {pipeline_mode = #tpu.pipeline_mode<synchronous>, transform_indices = @transform_3, window_bounds = array<i64: 1, 6>}, {transform_indices = @transform_4, window_bounds = array<i64: 16, 6>}, {transform_indices = @transform_5, window_bounds = array<i64: 16, 6>}, {transform_indices = @transform_6, window_bounds = array<i64: 1, 8, 128>}]} {
    %c0 = arith.constant 0 : index
    %c0_0 = arith.constant 0 : index
    %0 = vector.load %arg2[%c0, %c0_0] : memref<16x128xf32, #tpu.memory_space<vmem>>, vector<16x128xf32>
    %1 = tpu.iota {dimensions = array<i32: 0>} : vector<16x128xi32>
    %2 = tpu.iota {dimensions = array<i32: 1>} : vector<16x128xi32>
    %c16_i32 = arith.constant 16 : i32
    %3 = arith.muli %arg0, %c16_i32 : i32
    %4 = vector.broadcast %3 : i32 to vector<16x128xi32>
    %5 = arith.addi %1, %4 : vector<16x128xi32>
    %c128_i32 = arith.constant 128 : i32
    %6 = vector.broadcast %c128_i32 : i32 to vector<16x128xi32>
    %7 = arith.muli %5, %6 : vector<16x128xi32>
    %8 = arith.addi %7, %2 : vector<16x128xi32>
    %c0_1 = arith.constant 0 : index
    %9 = memref.load %arg1[%c0_1] : memref<1xi32, #tpu.memory_space<smem>>
    %c-1640531527_i32 = arith.constant -1640531527 : i32
    %10 = vector.broadcast %c-1640531527_i32 : i32 to vector<16x128xi32>
    %11 = arith.muli %8, %10 : vector<16x128xi32>
    %12 = vector.broadcast %9 : i32 to vector<16x128xi32>
    %13 = arith.addi %11, %12 : vector<16x128xi32>
    %c16_i32_2 = arith.constant 16 : i32
    %14 = vector.broadcast %c16_i32_2 : i32 to vector<16x128xi32>
    %15 = arith.shrui %13, %14 : vector<16x128xi32>
    %16 = arith.xori %13, %15 : vector<16x128xi32>
    %c2146121005_i32 = arith.constant 2146121005 : i32
    %17 = vector.broadcast %c2146121005_i32 : i32 to vector<16x128xi32>
    %18 = arith.muli %16, %17 : vector<16x128xi32>
    %c15_i32 = arith.constant 15 : i32
    %19 = vector.broadcast %c15_i32 : i32 to vector<16x128xi32>
    %20 = arith.shrui %18, %19 : vector<16x128xi32>
    %21 = arith.xori %18, %20 : vector<16x128xi32>
    %c-2073254261_i32 = arith.constant -2073254261 : i32
    %22 = vector.broadcast %c-2073254261_i32 : i32 to vector<16x128xi32>
    %23 = arith.muli %21, %22 : vector<16x128xi32>
    %c16_i32_3 = arith.constant 16 : i32
    %24 = vector.broadcast %c16_i32_3 : i32 to vector<16x128xi32>
    %25 = arith.shrui %23, %24 : vector<16x128xi32>
    %26 = arith.xori %23, %25 : vector<16x128xi32>
    %cst = arith.constant 0.000000e+00 : f32
    %27 = vector.broadcast %cst : f32 to vector<16x128xf32>
    %c1013904242_i32 = arith.constant 1013904242 : i32
    %28 = vector.broadcast %c1013904242_i32 : i32 to vector<16x128xi32>
    %29 = arith.xori %26, %28 : vector<16x128xi32>
    %c16_i32_4 = arith.constant 16 : i32
    %30 = vector.broadcast %c16_i32_4 : i32 to vector<16x128xi32>
    %31 = arith.shrui %29, %30 : vector<16x128xi32>
    %32 = arith.xori %29, %31 : vector<16x128xi32>
    %c2146121005_i32_5 = arith.constant 2146121005 : i32
    %33 = vector.broadcast %c2146121005_i32_5 : i32 to vector<16x128xi32>
    %34 = arith.muli %32, %33 : vector<16x128xi32>
    %c15_i32_6 = arith.constant 15 : i32
    %35 = vector.broadcast %c15_i32_6 : i32 to vector<16x128xi32>
    %36 = arith.shrui %34, %35 : vector<16x128xi32>
    %37 = arith.xori %34, %36 : vector<16x128xi32>
    %c-2073254261_i32_7 = arith.constant -2073254261 : i32
    %38 = vector.broadcast %c-2073254261_i32_7 : i32 to vector<16x128xi32>
    %39 = arith.muli %37, %38 : vector<16x128xi32>
    %c16_i32_8 = arith.constant 16 : i32
    %40 = vector.broadcast %c16_i32_8 : i32 to vector<16x128xi32>
    %41 = arith.shrui %39, %40 : vector<16x128xi32>
    %42 = arith.xori %39, %41 : vector<16x128xi32>
    %c429496730_i32 = arith.constant 429496730 : i32
    %43 = vector.broadcast %c429496730_i32 : i32 to vector<16x128xi32>
    %44 = arith.cmpi uge, %42, %43 : vector<16x128xi32>
    %cst_9 = arith.constant 0.222222224 : f32
    %cst_10 = arith.constant 0.000000e+00 : f32
    %45 = vector.broadcast %cst_9 : f32 to vector<16x128xf32>
    %46 = vector.broadcast %cst_10 : f32 to vector<16x128xf32>
    %47 = arith.select %44, %45, %46 : vector<16x128xi1>, vector<16x128xf32>
    %48 = arith.addf %27, %47 : vector<16x128xf32>
    %c-626627285_i32 = arith.constant -626627285 : i32
    %49 = vector.broadcast %c-626627285_i32 : i32 to vector<16x128xi32>
    %50 = arith.xori %26, %49 : vector<16x128xi32>
    %c16_i32_11 = arith.constant 16 : i32
    %51 = vector.broadcast %c16_i32_11 : i32 to vector<16x128xi32>
    %52 = arith.shrui %50, %51 : vector<16x128xi32>
    %53 = arith.xori %50, %52 : vector<16x128xi32>
    %c2146121005_i32_12 = arith.constant 2146121005 : i32
    %54 = vector.broadcast %c2146121005_i32_12 : i32 to vector<16x128xi32>
    %55 = arith.muli %53, %54 : vector<16x128xi32>
    %c15_i32_13 = arith.constant 15 : i32
    %56 = vector.broadcast %c15_i32_13 : i32 to vector<16x128xi32>
    %57 = arith.shrui %55, %56 : vector<16x128xi32>
    %58 = arith.xori %55, %57 : vector<16x128xi32>
    %c-2073254261_i32_14 = arith.constant -2073254261 : i32
    %59 = vector.broadcast %c-2073254261_i32_14 : i32 to vector<16x128xi32>
    %60 = arith.muli %58, %59 : vector<16x128xi32>
    %c16_i32_15 = arith.constant 16 : i32
    %61 = vector.broadcast %c16_i32_15 : i32 to vector<16x128xi32>
    %62 = arith.shrui %60, %61 : vector<16x128xi32>
    %63 = arith.xori %60, %62 : vector<16x128xi32>
    %c858993459_i32 = arith.constant 858993459 : i32
    %64 = vector.broadcast %c858993459_i32 : i32 to vector<16x128xi32>
    %65 = arith.cmpi uge, %63, %64 : vector<16x128xi32>
    %cst_16 = arith.constant 2.500000e-01 : f32
    %cst_17 = arith.constant 0.000000e+00 : f32
    %66 = vector.broadcast %cst_16 : f32 to vector<16x128xf32>
    %67 = vector.broadcast %cst_17 : f32 to vector<16x128xf32>
    %68 = arith.select %65, %66, %67 : vector<16x128xi1>, vector<16x128xf32>
    %69 = arith.addf %48, %68 : vector<16x128xf32>
    %c2027808484_i32 = arith.constant 2027808484 : i32
    %70 = vector.broadcast %c2027808484_i32 : i32 to vector<16x128xi32>
    %71 = arith.xori %26, %70 : vector<16x128xi32>
    %c16_i32_18 = arith.constant 16 : i32
    %72 = vector.broadcast %c16_i32_18 : i32 to vector<16x128xi32>
    %73 = arith.shrui %71, %72 : vector<16x128xi32>
    %74 = arith.xori %71, %73 : vector<16x128xi32>
    %c2146121005_i32_19 = arith.constant 2146121005 : i32
    %75 = vector.broadcast %c2146121005_i32_19 : i32 to vector<16x128xi32>
    %76 = arith.muli %74, %75 : vector<16x128xi32>
    %c15_i32_20 = arith.constant 15 : i32
    %77 = vector.broadcast %c15_i32_20 : i32 to vector<16x128xi32>
    %78 = arith.shrui %76, %77 : vector<16x128xi32>
    %79 = arith.xori %76, %78 : vector<16x128xi32>
    %c-2073254261_i32_21 = arith.constant -2073254261 : i32
    %80 = vector.broadcast %c-2073254261_i32_21 : i32 to vector<16x128xi32>
    %81 = arith.muli %79, %80 : vector<16x128xi32>
    %c16_i32_22 = arith.constant 16 : i32
    %82 = vector.broadcast %c16_i32_22 : i32 to vector<16x128xi32>
    %83 = arith.shrui %81, %82 : vector<16x128xi32>
    %84 = arith.xori %81, %83 : vector<16x128xi32>
    %c1288490189_i32 = arith.constant 1288490189 : i32
    %85 = vector.broadcast %c1288490189_i32 : i32 to vector<16x128xi32>
    %86 = arith.cmpi uge, %84, %85 : vector<16x128xi32>
    %cst_23 = arith.constant 0.285714298 : f32
    %cst_24 = arith.constant 0.000000e+00 : f32
    %87 = vector.broadcast %cst_23 : f32 to vector<16x128xf32>
    %88 = vector.broadcast %cst_24 : f32 to vector<16x128xf32>
    %89 = arith.select %86, %87, %88 : vector<16x128xi1>, vector<16x128xf32>
    %90 = arith.addf %69, %89 : vector<16x128xf32>
    %c387276957_i32 = arith.constant 387276957 : i32
    %91 = vector.broadcast %c387276957_i32 : i32 to vector<16x128xi32>
    %92 = arith.xori %26, %91 : vector<16x128xi32>
    %c16_i32_25 = arith.constant 16 : i32
    %93 = vector.broadcast %c16_i32_25 : i32 to vector<16x128xi32>
    %94 = arith.shrui %92, %93 : vector<16x128xi32>
    %95 = arith.xori %92, %94 : vector<16x128xi32>
    %c2146121005_i32_26 = arith.constant 2146121005 : i32
    %96 = vector.broadcast %c2146121005_i32_26 : i32 to vector<16x128xi32>
    %97 = arith.muli %95, %96 : vector<16x128xi32>
    %c15_i32_27 = arith.constant 15 : i32
    %98 = vector.broadcast %c15_i32_27 : i32 to vector<16x128xi32>
    %99 = arith.shrui %97, %98 : vector<16x128xi32>
    %100 = arith.xori %97, %99 : vector<16x128xi32>
    %c-2073254261_i32_28 = arith.constant -2073254261 : i32
    %101 = vector.broadcast %c-2073254261_i32_28 : i32 to vector<16x128xi32>
    %102 = arith.muli %100, %101 : vector<16x128xi32>
    %c16_i32_29 = arith.constant 16 : i32
    %103 = vector.broadcast %c16_i32_29 : i32 to vector<16x128xi32>
    %104 = arith.shrui %102, %103 : vector<16x128xi32>
    %105 = arith.xori %102, %104 : vector<16x128xi32>
    %c1717986918_i32 = arith.constant 1717986918 : i32
    %106 = vector.broadcast %c1717986918_i32 : i32 to vector<16x128xi32>
    %107 = arith.cmpi uge, %105, %106 : vector<16x128xi32>
    %cst_30 = arith.constant 0.333333343 : f32
    %cst_31 = arith.constant 0.000000e+00 : f32
    %108 = vector.broadcast %cst_30 : f32 to vector<16x128xf32>
    %109 = vector.broadcast %cst_31 : f32 to vector<16x128xf32>
    %110 = arith.select %107, %108, %109 : vector<16x128xi1>, vector<16x128xf32>
    %111 = arith.addf %90, %110 : vector<16x128xf32>
    %c-1253254570_i32 = arith.constant -1253254570 : i32
    %112 = vector.broadcast %c-1253254570_i32 : i32 to vector<16x128xi32>
    %113 = arith.xori %26, %112 : vector<16x128xi32>
    %c16_i32_32 = arith.constant 16 : i32
    %114 = vector.broadcast %c16_i32_32 : i32 to vector<16x128xi32>
    %115 = arith.shrui %113, %114 : vector<16x128xi32>
    %116 = arith.xori %113, %115 : vector<16x128xi32>
    %c2146121005_i32_33 = arith.constant 2146121005 : i32
    %117 = vector.broadcast %c2146121005_i32_33 : i32 to vector<16x128xi32>
    %118 = arith.muli %116, %117 : vector<16x128xi32>
    %c15_i32_34 = arith.constant 15 : i32
    %119 = vector.broadcast %c15_i32_34 : i32 to vector<16x128xi32>
    %120 = arith.shrui %118, %119 : vector<16x128xi32>
    %121 = arith.xori %118, %120 : vector<16x128xi32>
    %c-2073254261_i32_35 = arith.constant -2073254261 : i32
    %122 = vector.broadcast %c-2073254261_i32_35 : i32 to vector<16x128xi32>
    %123 = arith.muli %121, %122 : vector<16x128xi32>
    %c16_i32_36 = arith.constant 16 : i32
    %124 = vector.broadcast %c16_i32_36 : i32 to vector<16x128xi32>
    %125 = arith.shrui %123, %124 : vector<16x128xi32>
    %126 = arith.xori %123, %125 : vector<16x128xi32>
    %c-2147483648_i32 = arith.constant -2147483648 : i32
    %127 = vector.broadcast %c-2147483648_i32 : i32 to vector<16x128xi32>
    %128 = arith.cmpi uge, %126, %127 : vector<16x128xi32>
    %cst_37 = arith.constant 4.000000e-01 : f32
    %cst_38 = arith.constant 0.000000e+00 : f32
    %129 = vector.broadcast %cst_37 : f32 to vector<16x128xf32>
    %130 = vector.broadcast %cst_38 : f32 to vector<16x128xf32>
    %131 = arith.select %128, %129, %130 : vector<16x128xi1>, vector<16x128xf32>
    %132 = arith.addf %111, %131 : vector<16x128xf32>
    %133 = arith.mulf %0, %132 : vector<16x128xf32>
    %134 = arith.truncf %133 : vector<16x128xf32> to vector<16x128xbf16>
    %c0_39 = arith.constant 0 : index
    %c0_40 = arith.constant 0 : index
    %135 = vector.load %arg3[%c0_39, %c0_40] : memref<128x6xbf16, #tpu.memory_space<vmem>>, vector<128x6xbf16>
    %cst_41 = arith.constant dense<0.000000e+00> : vector<16x6xf32>
    %136 = tpu.matmul %134, %135, %cst_41 {dimension_numbers = #tpu.dot_dimension_numbers<[1], [0], [0], [1], [0, 0, 1, 1], [], []>} : vector<16x128xbf16>, vector<128x6xbf16>, vector<16x6xf32> -> vector<16x6xf32>
    %c0_42 = arith.constant 0 : index
    %c0_43 = arith.constant 0 : index
    %137 = vector.load %arg4[%c0_42, %c0_43] : memref<1x6xf32, #tpu.memory_space<vmem>>, vector<1x6xf32>
    %138 = vector.broadcast %137 : vector<1x6xf32> to vector<16x6xf32>
    %139 = arith.addf %136, %138 : vector<16x6xf32>
    %c0_44 = arith.constant 0 : index
    %c0_45 = arith.constant 0 : index
    %140 = vector.load %arg6[%c0_44, %c0_45] : memref<16x6xf32, #tpu.memory_space<vmem>>, vector<16x6xf32>
    tpu.vector_store %arg6[%c0_44, %c0_45], %139 {strides = array<i32>} : memref<16x6xf32, #tpu.memory_space<vmem>>, vector<16x6xf32>,
    %141 = tpu.iota {dimensions = array<i32: 0>} : vector<16x1xi32>
    %c16_i32_46 = arith.constant 16 : i32
    %142 = arith.muli %arg0, %c16_i32_46 : i32
    %143 = vector.broadcast %142 : i32 to vector<16x1xi32>
    %144 = arith.addi %141, %143 : vector<16x1xi32>
    %c16_i32_47 = arith.constant 16 : i32
    %145 = vector.broadcast %c16_i32_47 : i32 to vector<16x1xi32>
    %146 = arith.cmpi slt, %144, %145 : vector<16x1xi32>
    %147 = arith.extui %146 : vector<16x1xi1> to vector<16x1xi32>
    %148 = arith.sitofp %147 : vector<16x1xi32> to vector<16x1xf32>
    %c0_48 = arith.constant 0 : index
    %c0_49 = arith.constant 0 : index
    %149 = vector.load %arg5[%c0_48, %c0_49] : memref<16x6xf32, #tpu.memory_space<vmem>>, vector<16x6xf32>
    %150 = arith.subf %139, %149 : vector<16x6xf32>
    %151 = vector.broadcast %148 : vector<16x1xf32> to vector<16x6xf32>
    %152 = arith.mulf %150, %151 : vector<16x6xf32>
    %153 = arith.mulf %152, %152 : vector<16x6xf32>
    %154 = vector.shape_cast %153 : vector<16x6xf32> to vector<1x16x6xf32>
    %cst_50 = arith.constant dense<0.000000e+00> : vector<1xf32>
    %155 = vector.multi_reduction <add>, %154, %cst_50 [1, 2] : vector<1x16x6xf32> to vector<1xf32>
    %156 = vector.shape_cast %155 : vector<1xf32> to vector<1x1x1xf32>
    %157 = vector.extract %156[0, 0, 0] : f32 from vector<1x1x1xf32>
    %158 = vector.broadcast %157 : f32 to vector<1x8x128xf32>
    %c0_51 = arith.constant 0 : index
    %c0_52 = arith.constant 0 : index
    %c0_53 = arith.constant 0 : index
    %159 = vector.load %arg7[%c0_51, %c0_52, %c0_53] : memref<1x8x128xf32, #tpu.memory_space<vmem>>, vector<1x8x128xf32>
    tpu.vector_store %arg7[%c0_51, %c0_52, %c0_53], %158 {strides = array<i32>} : memref<1x8x128xf32, #tpu.memory_space<vmem>>, vector<1x8x128xf32>,
    return
  }
  func.func @transform_0(%arg0: i32) -> i32 {
    %c0_i32 = arith.constant 0 : i32
    %c0_i32_0 = arith.constant 0 : i32
    return %c0_i32 : i32
  }
  func.func @transform_1(%arg0: i32) -> (i32, i32) {
    %c0_i32 = arith.constant 0 : i32
    %c0_i32_0 = arith.constant 0 : i32
    return %arg0, %c0_i32 : i32, i32
  }
  func.func @transform_2(%arg0: i32) -> (i32, i32) {
    %c0_i32 = arith.constant 0 : i32
    %c0_i32_0 = arith.constant 0 : i32
    %c0_i32_1 = arith.constant 0 : i32
    return %c0_i32, %c0_i32_0 : i32, i32
  }
  func.func @transform_3(%arg0: i32) -> (i32, i32) {
    %c0_i32 = arith.constant 0 : i32
    %c0_i32_0 = arith.constant 0 : i32
    %c0_i32_1 = arith.constant 0 : i32
    return %c0_i32, %c0_i32_0 : i32, i32
  }
  func.func @transform_4(%arg0: i32) -> (i32, i32) {
    %c0_i32 = arith.constant 0 : i32
    %c0_i32_0 = arith.constant 0 : i32
    return %arg0, %c0_i32 : i32, i32
  }
  func.func @transform_5(%arg0: i32) -> (i32, i32) {
    %c0_i32 = arith.constant 0 : i32
    %c0_i32_0 = arith.constant 0 : i32
    return %arg0, %c0_i32 : i32, i32
  }
  func.func @transform_6(%arg0: i32) -> (i32, i32, i32) {
    %c0_i32 = arith.constant 0 : i32
    %c0_i32_0 = arith.constant 0 : i32
    %c0_i32_1 = arith.constant 0 : i32
    return %arg0, %c0_i32, %c0_i32_0 : i32, i32, i32
  }
}

</mosaic_0001>

<llo_original>
// kernel: tpu_custom_call.1
$region0: #{tpu_custom_call.1}
  #allocation0 [shape = 'u32[]', space=smem, size = 0x4, offset = 0x4, fixed_abs, tag = 'smem constant byte address 0x4 - core index']
  #allocation1 [shape = 'u32[144,128]{1,0:T(1,128)}', space=vmem, size = 0x12000, scoped, tag = 'internal scratch']
  #allocation2 [shape = 's32[1]{0:T(128)S(6)}', space=smem, size = 0x200, scoped, tag = 'scoped memory for tpu_custom_call.1']
  %s0 = inlined_call_operand.<no memory space> [shape: s32[1], index: 0, kind: input, shape index: {}]
  %s1 = inlined_call_operand.vmem [shape: f32[16,128], index: 1, kind: input, shape index: {}]
  %s2 = inlined_call_operand.vmem [shape: bf16[128,6], index: 2, kind: input, shape index: {}]
  %s3 = inlined_call_operand.vmem [shape: f32[1,6], index: 3, kind: input, shape index: {}]
  %s4 = inlined_call_operand.vmem [shape: f32[16,6], index: 4, kind: input, shape index: {}]
  %s5 = inlined_call_operand.vmem [shape: f32[16,6], index: 5, kind: output, shape index: {0}]
  %s6 = inlined_call_operand.hbm [shape: f32[1,8,128], index: 6, kind: output, shape index: {1}]
  %7 = xla_tuple %s5, %s6
  %s8 = sld [smem:[#allocation0]]
  $region38: #{tpu_custom_call.1} parent=0
    _
  %s10 = ssub.s32 1, %s8
  %s11 = scalar_select 0, %s10, %s8
  %12 = sst [smem:[#allocation2]] %s0
  $region1: #{tpu_custom_call.1} parent=0
    #allocation3 [shape = 'u8[4096]{0}', space=vmem, size = 0x1000, scoped, tag = 'output window, operand 1, single buffered']
    #allocation4 [shape = 's32[1]{0}', space=sflag, size = 0x4, scoped, tag = 'scoped memory for tpu_custom_call.1']
    %13 = vsyncpa [#allocation4], 0
    // Predicated region
    $region2: #{tpu_custom_call.1} parent=1 // pred_check
      _
    $region3: #{tpu_custom_call.1} parent=1 // pred_check_branch
      %15 = sbr.rel (0) target = $region5
    $region4: #{tpu_custom_call.1} parent=1 // pred_region
      _
    $region5: #{tpu_custom_call.1} parent=1 // pred_fallthru
      _
    // Predicated region
    $region6: #{tpu_custom_call.1} parent=1 // pred_check
      _
    $region7: #{tpu_custom_call.1} parent=1 // pred_check_branch
      %17 = sbr.rel (0) target = $region9
    $region8: #{tpu_custom_call.1} parent=1 // pred_region
      _
    $region9: #{tpu_custom_call.1} parent=1 // pred_fallthru
      _
    // Predicated region
    $region10: #{tpu_custom_call.1} parent=1 // pred_check
      _
    $region11: #{tpu_custom_call.1} parent=1 // pred_check_branch
      %19 = sbr.rel (0) target = $region13
    $region12: #{tpu_custom_call.1} parent=1 // pred_region
      _
    $region13: #{tpu_custom_call.1} parent=1 // pred_fallthru
      _
    // Predicated region
    $region14: #{tpu_custom_call.1} parent=1 // pred_check
      _
    $region15: #{tpu_custom_call.1} parent=1 // pred_check_branch
      %21 = sbr.rel (0) target = $region17
    $region16: #{tpu_custom_call.1} parent=1 // pred_region
      _
    $region17: #{tpu_custom_call.1} parent=1 // pred_fallthru
      _
    // Predicated region
    $region18: #{tpu_custom_call.1} parent=1 // pred_check
      _
    $region19: #{tpu_custom_call.1} parent=1 // pred_check_branch
      %23 = sbr.rel (0) target = $region21
    $region20: #{tpu_custom_call.1} parent=1 // pred_region
      _
    $region21: #{tpu_custom_call.1} parent=1 // pred_fallthru
      _
    %v25 = vld [vmem:[%s1] sm:$0xff]
    %v26 = vld [vmem:[%s1 + $0x8] sm:$0xff]
    %v27 = vlaneseq
    %v28 = vshrl.u32 %v27, 7
    %v29 = vadd.s32 %v28, 8
    %v30 = vlaneseq
    %v31 = vand.u32 %v30, 127
    %s32 = smul.u32 0, 16
    %v33 = vstv %s32
    %v34 = vadd.s32 %v28, %v33
    %v35 = vadd.s32 %v29, %v33
    %v36 = vmul.u32 %v34, 128
    %v37 = vmul.u32 %v35, 128
    %v38 = vadd.s32 %v36, %v31
    %v39 = vadd.s32 %v37, %v31
    %s40 = sld [smem:[#allocation2]]
    %v41 = vmul.u32 %v38, 2654435769
    %v42 = vmul.u32 %v39, 2654435769
    %v43 = vstv %s40
    %v44 = vadd.s32 %v41, %v43
    %v45 = vadd.s32 %v42, %v43
    %v46 = vshrl.u32 %v44, 16
    %v47 = vshrl.u32 %v45, 16
    %v48 = vxor.u32 %v44, %v46
    %v49 = vxor.u32 %v45, %v47
    %v50 = vmul.u32 %v48, 2146121005
    %v51 = vmul.u32 %v49, 2146121005
    %v52 = vshrl.u32 %v50, 15
    %v53 = vshrl.u32 %v51, 15
    %v54 = vxor.u32 %v50, %v52
    %v55 = vxor.u32 %v51, %v53
    %v56 = vmul.u32 %v54, 2221713035
    %v57 = vmul.u32 %v55, 2221713035
    %v58 = vshrl.u32 %v56, 16
    %v59 = vshrl.u32 %v57, 16
    %v60 = vxor.u32 %v56, %v58
    %v61 = vxor.u32 %v57, %v59
    %v62 = vxor.u32 %v60, 1013904242
    %v63 = vxor.u32 %v61, 1013904242
    %v64 = vshrl.u32 %v62, 16
    %v65 = vshrl.u32 %v63, 16
    %v66 = vxor.u32 %v62, %v64
    %v67 = vxor.u32 %v63, %v65
    %v68 = vmul.u32 %v66, 2146121005
    %v69 = vmul.u32 %v67, 2146121005
    %v70 = vshrl.u32 %v68, 15
    %v71 = vshrl.u32 %v69, 15
    %v72 = vxor.u32 %v68, %v70
    %v73 = vxor.u32 %v69, %v71
    %v74 = vmul.u32 %v72, 2221713035
    %v75 = vmul.u32 %v73, 2221713035
    %v76 = vshrl.u32 %v74, 16
    %v77 = vshrl.u32 %v75, 16
    %v78 = vxor.u32 %v74, %v76
    %v79 = vxor.u32 %v75, %v77
    %vm80 = vcmp.ge.u32.totalorder %v78, 429496730
    %vm81 = vcmp.ge.u32.totalorder %v79, 429496730
    %v82 = vsel %vm80, 0.22222222, 0.0
    %v83 = vsel %vm81, 0.22222222, 0.0
    %v84 = vadd.f32 %v82, 0.0
    %v85 = vadd.f32 %v83, 0.0
    %v86 = vxor.u32 %v60, 3668340011
    %v87 = vxor.u32 %v61, 3668340011
    %v88 = vshrl.u32 %v86, 16
    %v89 = vshrl.u32 %v87, 16
    %v90 = vxor.u32 %v86, %v88
    %v91 = vxor.u32 %v87, %v89
    %v92 = vmul.u32 %v90, 2146121005
    %v93 = vmul.u32 %v91, 2146121005
    %v94 = vshrl.u32 %v92, 15
    %v95 = vshrl.u32 %v93, 15
    %v96 = vxor.u32 %v92, %v94
    %v97 = vxor.u32 %v93, %v95
    %v98 = vmul.u32 %v96, 2221713035
    %v99 = vmul.u32 %v97, 2221713035
    %v100 = vshrl.u32 %v98, 16
    %v101 = vshrl.u32 %v99, 16
    %v102 = vxor.u32 %v98, %v100
    %v103 = vxor.u32 %v99, %v101
    %vm104 = vcmp.ge.u32.totalorder %v102, 858993459
    %vm105 = vcmp.ge.u32.totalorder %v103, 858993459
    %v106 = vsel %vm104, 0.25, 0.0
    %v107 = vsel %vm105, 0.25, 0.0
    %v108 = vadd.f32 %v84, %v106
    %v109 = vadd.f32 %v85, %v107
    %v110 = vxor.u32 %v60, 2027808484
    %v111 = vxor.u32 %v61, 2027808484
    %v112 = vshrl.u32 %v110, 16
    %v113 = vshrl.u32 %v111, 16
    %v114 = vxor.u32 %v110, %v112
    %v115 = vxor.u32 %v111, %v113
    %v116 = vmul.u32 %v114, 2146121005
    %v117 = vmul.u32 %v115, 2146121005
    %v118 = vshrl.u32 %v116, 15
    %v119 = vshrl.u32 %v117, 15
    %v120 = vxor.u32 %v116, %v118
    %v121 = vxor.u32 %v117, %v119
    %v122 = vmul.u32 %v120, 2221713035
    %v123 = vmul.u32 %v121, 2221713035
    %v124 = vshrl.u32 %v122, 16
    %v125 = vshrl.u32 %v123, 16
    %v126 = vxor.u32 %v122, %v124
    %v127 = vxor.u32 %v123, %v125
    %vm128 = vcmp.ge.u32.totalorder %v126, 1288490189
    %vm129 = vcmp.ge.u32.totalorder %v127, 1288490189
    %v130 = vsel %vm128, 0.2857143, 0.0
    %v131 = vsel %vm129, 0.2857143, 0.0
    %v132 = vadd.f32 %v108, %v130
    %v133 = vadd.f32 %v109, %v131
    %v134 = vxor.u32 %v60, 387276957
    %v135 = vxor.u32 %v61, 387276957
    %v136 = vshrl.u32 %v134, 16
    %v137 = vshrl.u32 %v135, 16
    %v138 = vxor.u32 %v134, %v136
    %v139 = vxor.u32 %v135, %v137
    %v140 = vmul.u32 %v138, 2146121005
    %v141 = vmul.u32 %v139, 2146121005
    %v142 = vshrl.u32 %v140, 15
    %v143 = vshrl.u32 %v141, 15
    %v144 = vxor.u32 %v140, %v142
    %v145 = vxor.u32 %v141, %v143
    %v146 = vmul.u32 %v144, 2221713035
    %v147 = vmul.u32 %v145, 2221713035
    %v148 = vshrl.u32 %v146, 16
    %v149 = vshrl.u32 %v147, 16
    %v150 = vxor.u32 %v146, %v148
    %v151 = vxor.u32 %v147, %v149
    %vm152 = vcmp.ge.u32.totalorder %v150, 1717986918
    %vm153 = vcmp.ge.u32.totalorder %v151, 1717986918
    %v154 = vsel %vm152, 0.33333334, 0.0
    %v155 = vsel %vm153, 0.33333334, 0.0
    %v156 = vadd.f32 %v132, %v154
    %v157 = vadd.f32 %v133, %v155
    %v158 = vxor.u32 %v60, 3041712726
    %v159 = vxor.u32 %v61, 3041712726
    %v160 = vshrl.u32 %v158, 16
    %v161 = vshrl.u32 %v159, 16
    %v162 = vxor.u32 %v158, %v160
    %v163 = vxor.u32 %v159, %v161
    %v164 = vmul.u32 %v162, 2146121005
    %v165 = vmul.u32 %v163, 2146121005
    %v166 = vshrl.u32 %v164, 15
    %v167 = vshrl.u32 %v165, 15
    %v168 = vxor.u32 %v164, %v166
    %v169 = vxor.u32 %v165, %v167
    %v170 = vmul.u32 %v168, 2221713035
    %v171 = vmul.u32 %v169, 2221713035
    %v172 = vshrl.u32 %v170, 16
    %v173 = vshrl.u32 %v171, 16
    %v174 = vxor.u32 %v170, %v172
    %v175 = vxor.u32 %v171, %v173
    %vm176 = vcmp.ge.u32.totalorder %v174, 2147483648
    %vm177 = vcmp.ge.u32.totalorder %v175, 2147483648
    %v178 = vsel %vm176, 0.4, 0.0
    %v179 = vsel %vm177, 0.4, 0.0
    %v180 = vadd.f32 %v156, %v178
    %v181 = vadd.f32 %v157, %v179
    %v182 = vmul.f32 %v25, %v180
    %v183 = vmul.f32 %v26, %v181
    %v184 = vpack.c.bf16 %v183, %v182
    %v185 = vld [vmem:[%s2] sm:$0xf]
    %v186 = vld [vmem:[%s2 + $0x4] sm:$0xf]
    %v187 = vld [vmem:[%s2 + $0x8] sm:$0xf]
    %v188 = vld [vmem:[%s2 + $0xc] sm:$0xf]
    %v189 = vld [vmem:[%s2 + $0x10] sm:$0xf]
    %v190 = vld [vmem:[%s2 + $0x14] sm:$0xf]
    %v191 = vld [vmem:[%s2 + $0x18] sm:$0xf]
    %v192 = vld [vmem:[%s2 + $0x1c] sm:$0xf]
    %v193 = vld [vmem:[%s2 + $0x20] sm:$0xf]
    %v194 = vld [vmem:[%s2 + $0x24] sm:$0xf]
    %v195 = vld [vmem:[%s2 + $0x28] sm:$0xf]
    %v196 = vld [vmem:[%s2 + $0x2c] sm:$0xf]
    %v197 = vld [vmem:[%s2 + $0x30] sm:$0xf]
    %v198 = vld [vmem:[%s2 + $0x34] sm:$0xf]
    %v199 = vld [vmem:[%s2 + $0x38] sm:$0xf]
    %v200 = vld [vmem:[%s2 + $0x3c] sm:$0xf]
    %v201 = vld [vmem:[%s3] sm:$0x1]
    %v203 = vlaneseq
    %v204 = vshrl.u32 %v203, 7
    %v205 = vsub.s32 0, %v204
    %v206 = vrot.slane %v201, %v205
    %v224 = vunpack.c.l.b16 %v185
    %v225 = vunpack.c.l.b16 %v186
    %v226 = vunpack.c.l.b16 %v187
    %v227 = vunpack.c.l.b16 %v188
    %v228 = vunpack.c.l.b16 %v189
    %v229 = vunpack.c.l.b16 %v190
    %v230 = vunpack.c.l.b16 %v191
    %v231 = vunpack.c.l.b16 %v192
    %v232 = vunpack.c.l.b16 %v193
    %v233 = vunpack.c.l.b16 %v194
    %v234 = vunpack.c.l.b16 %v195
    %v235 = vunpack.c.l.b16 %v196
    %v236 = vunpack.c.l.b16 %v197
    %v237 = vunpack.c.l.b16 %v198
    %v238 = vunpack.c.l.b16 %v199
    %v239 = vunpack.c.l.b16 %v200
    %v240 = vpack.c.b16 %v225, %v224
    %v241 = vpack.c.b16 %v227, %v226
    %v242 = vpack.c.b16 %v229, %v228
    %v243 = vpack.c.b16 %v231, %v230
    %v244 = vpack.c.b16 %v233, %v232
    %v245 = vpack.c.b16 %v235, %v234
    %v246 = vpack.c.b16 %v237, %v236
    %v247 = vpack.c.b16 %v239, %v238
    %256 = vmatprep.subr.bf16.mxu0 0
    %257 = vmatpush1.bf16.msra.mxu0 %v240
    %258 = vmatprep.subr.bf16.mxu0 0
    %259 = vmatpush1.bf16.msra.mxu0 %v241
    %260 = vmatprep.subr.bf16.mxu0 0
    %261 = vmatpush1.bf16.msra.mxu0 %v242
    %262 = vmatprep.subr.bf16.mxu0 0
    %263 = vmatpush1.bf16.msra.mxu0 %v243
    %264 = vmatprep.subr.bf16.mxu0 0
    %265 = vmatpush1.bf16.msra.mxu0 %v244
    %266 = vmatprep.subr.bf16.mxu0 0
    %267 = vmatpush1.bf16.msra.mxu0 %v245
    %268 = vmatprep.subr.bf16.mxu0 0
    %269 = vmatpush1.bf16.msra.mxu0 %v246
    %270 = vmatprep.subr.bf16.mxu0 0
    %271 = vmatpush1.bf16.msra.mxu0 %v247
    %272 = vmatprep.subr.bf16.mxu0 0
    %273 = vmatpush1.bf16.msra.mxu0 0
    %274 = vmatprep.subr.bf16.mxu0 0
    %275 = vmatpush1.bf16.msra.mxu0 0
    %276 = vmatprep.subr.bf16.mxu0 0
    %277 = vmatpush1.bf16.msra.mxu0 0
    %278 = vmatprep.subr.bf16.mxu0 0
    %279 = vmatpush1.bf16.msra.mxu0 0
    %280 = vmatprep.subr.bf16.mxu0 0
    %281 = vmatpush1.bf16.msra.mxu0 0
    %282 = vmatprep.subr.bf16.mxu0 0
    %283 = vmatpush1.bf16.msra.mxu0 0
    %284 = vmatprep.subr.bf16.mxu0 0
    %285 = vmatpush1.bf16.msra.mxu0 0
    %286 = vmatprep.subr.bf16.mxu0 0
    %287 = vmatpush1.bf16.msra.mxu0 0
    %288 = vmatprep.mubr.bf16.mxu0 0
    %289 = vmatmul.mubr.bf16.gmra.mrb[0].mxu0 %v184
    %v290 = vpop.f32.mrb[0].mxu0
    %v291 = vadd.f32 %v206, %v290
    %v292 = vpop.f32.mrb[0].mxu0
    %v293 = vpop.f32.mrb[0].mxu0
    %v294 = vadd.f32 %v206, %v293
    %v295 = vpop.f32.mrb[0].mxu0
    %296 = vdwg.mxu0
    %vm297 = vcmask 48128
    %298 = vst.msk [vmem:[%s5] sm:$0xff] %vm297, %v291
    %299 = vst.msk [vmem:[%s5 + $0x8] sm:$0xff] %vm297, %v294
    %vm300 = vcmp.lt.s32.totalorder %v34, 16
    %vm301 = vcmp.lt.s32.totalorder %v35, 16
    %v302 = vsel %vm300, 1, 0
    %v303 = vsel %vm301, 1, 0
    %v304 = vcvt.s32.f32 %v302
    %v305 = vcvt.s32.f32 %v303
    %v306 = vld [vmem:[%s4] sm:$0xff]
    %v307 = vld [vmem:[%s4 + $0x8] sm:$0xff]
    %v308 = vsub.f32 %v291, %v306
    %v309 = vsub.f32 %v294, %v307
    %v310 = vmul.f32 %v308, %v304
    %v311 = vmul.f32 %v309, %v305
    %v312 = vmul.f32 %v310, %v310
    %v313 = vmul.f32 %v311, %v311
    %v314 = vsel %vm297, %v312, 0.0
    %v315 = vsel %vm297, %v313, 0.0
    %v316 = vadd.f32 %v314, %v315
    %317 = vadd.xlane.f32.xlu0 %v316
    %v318 = vpop.xlane.xlu0 %317
    %v319 = vrot.slane %v318, 4
    %v320 = vadd.f32 %v318, %v319
    %v321 = vrot.slane %v320, 2
    %v322 = vadd.f32 %v320, %v321
    %v323 = vrot.slane %v322, 1
    %v324 = vadd.f32 %v322, %v323
    %s325 = vtos %v324
    %v326 = vstv %s325
    %327 = vst [vmem:[#allocation3] sm:$0xff] %v326
    // Predicated region
    $region22: #{tpu_custom_call.1} parent=1 // pred_check
      _
    $region23: #{tpu_custom_call.1} parent=1 // pred_check_branch
      %329 = sbr.rel (0) target = $region25
    $region24: #{tpu_custom_call.1} parent=1 // pred_region
      _
    $region25: #{tpu_custom_call.1} parent=1 // pred_fallthru
      _
    // Predicated region
    $region26: #{tpu_custom_call.1} parent=1 // pred_check
      _
    $region27: #{tpu_custom_call.1} parent=1 // pred_check_branch
      %331 = sbr.rel (0) target = $region29
    $region28: #{tpu_custom_call.1} parent=1 // pred_region
      %s333 = ssub.s32 128, 128
      %334 = vsyncadd [#allocation4], %s333
      %s336 = sshll.u32 [#allocation3], 4
      %s337 = int_to_ptr.vmem [resolvable:$true] %s336
      %339 = dma.vmem_to_hbm [thread:$0]  %s337, 128, %s6, [#allocation4]
    $region29: #{tpu_custom_call.1} parent=1 // pred_fallthru
      _
    // Predicated region
    $region30: #{tpu_custom_call.1} parent=1 // pred_check
      _
    $region31: #{tpu_custom_call.1} parent=1 // pred_check_branch
      %341 = sbr.rel (0) target = $region33
    $region32: #{tpu_custom_call.1} parent=1 // pred_region
      _
    $region33: #{tpu_custom_call.1} parent=1 // pred_fallthru
      _
    // Predicated region
    $region34: #{tpu_custom_call.1} parent=1 // pred_check
      _
    $region35: #{tpu_custom_call.1} parent=1 // pred_check_branch
      %343 = sbr.rel (0) target = $region37
    $region36: #{tpu_custom_call.1} parent=1 // pred_region
      %344 = dma.done [#allocation4], 128
    $region37: #{tpu_custom_call.1} parent=1 // pred_fallthru
      _
    %345 = vsyncpa [#allocation4], 1

</llo_original>
